<compile_context>
chip_gen: v7x
topology: tpu7x:2x2x1
jax: 0.10.0
libtpu: 0.0.40
codegen_flags: <defaults>
</compile_context>

<pallas_src>
import functools

import jax
import jax.numpy as jnp
from jax.experimental import pallas as pl
from jax.experimental.pallas import tpu as pltpu

LANE = 128
SUBLANE = 8
NCORES = 2              # leading "parallel" axis -> both TCs on v7x; harmless elsewhere
MAX_BLOCK_ROWS = 2048   # (2048,128) f32 = 1 MiB/block; well under the scoped-VMEM default


def _round_up(x, m):
    return ((x + m - 1) // m) * m


def _cdiv(a, b):
    return (a + b - 1) // b


def _qfocal_kernel(pred_ref, true_ref, out_ref, acc_ref, *,
                   gamma, alpha, n_elems, block_rows, blocks_per_core, need_mask):
    b = pl.program_id(1)

    @pl.when(b == 0)
    def _():
        acc_ref[...] = jnp.zeros_like(acc_ref)

    # Cast in-kernel (free VPU work) so the wrapper DMAs the native dtype.
    x = pred_ref[...].astype(jnp.float32)   # logits
    y = true_ref[...].astype(jnp.float32)   # targets

    # One exp shared between the stable BCE softplus and the sigmoid.
    e = jnp.exp(-jnp.abs(x))
    bce = jnp.maximum(x, 0.0) - x * y + jnp.log1p(e)   # BCEWithLogits, reduction='none'
    p = jnp.where(x >= 0.0, 1.0, e) / (1.0 + e)        # sigmoid(x), no second exp

    alpha_factor = y * alpha + (1.0 - y) * (1.0 - alpha)
    d = jnp.abs(y - p)
    if gamma == 2.0:
        mod = d * d
    elif gamma == 1.5:
        mod = d * jnp.sqrt(d)                          # avoids a pow() transcendental
    elif gamma == 1.0:
        mod = d
    else:
        mod = jnp.power(d, jnp.float32(gamma))
    loss = bce * alpha_factor * mod

    if need_mask:
        # Neutralize the zero-padded tail (only emitted when padding exists).
        blk = pl.program_id(0) * blocks_per_core + b
        base = blk * (block_rows * LANE)
        ridx = jax.lax.broadcasted_iota(jnp.int32, loss.shape, 0)
        cidx = jax.lax.broadcasted_iota(jnp.int32, loss.shape, 1)
        loss = jnp.where(base + ridx * LANE + cidx < n_elems, loss, 0.0)

    # Vreg-shaped partial sums: cross-vreg VPU adds each step, no per-step XLU reduce.
    acc_ref[...] += loss.reshape(-1, SUBLANE, LANE).sum(axis=0)

    @pl.when(b == pl.num_programs(1) - 1)
    def _():
        out_ref[...] = acc_ref[...].reshape(1, SUBLANE, LANE)


def qfocal_loss(pred, true, gamma=1.5, alpha=0.25, reduction="mean"):
    """Pallas-TPU QFocalLoss.forward (loss_fcn = BCEWithLogitsLoss).

    pred, true: arrays of identical shape (any rank, any float dtype).
    Returns a float32 scalar for reduction in {'mean', 'sum'}.
    """
    assert pred.shape == true.shape
    if reduction not in ("mean", "sum"):
        # TODO(synk): reduction='none' (unreduced elementwise output) not implemented.
        raise NotImplementedError("only 'mean' and 'sum' reductions are supported")

    n = pred.size
    flat_p = pred.reshape(-1)          # native dtype; cast happens in-kernel
    flat_t = true.reshape(-1)

    rows_needed = _cdiv(n, LANE)
    per_core_rows = _cdiv(rows_needed, NCORES)
    block_rows = min(MAX_BLOCK_ROWS, _round_up(per_core_rows, SUBLANE))
    blocks_per_core = _cdiv(rows_needed, NCORES * block_rows)
    rows_padded = NCORES * blocks_per_core * block_rows
    n_pad = rows_padded * LANE - n

    if n_pad:
        flat_p = jnp.pad(flat_p, (0, n_pad))
        flat_t = jnp.pad(flat_t, (0, n_pad))

    p2 = flat_p.reshape(rows_padded, LANE)
    t2 = flat_t.reshape(rows_padded, LANE)

    kernel = functools.partial(
        _qfocal_kernel,
        gamma=float(gamma),
        alpha=float(alpha),
        n_elems=n,
        block_rows=block_rows,
        blocks_per_core=blocks_per_core,
        need_mask=bool(n_pad),
    )

    in_spec = pl.BlockSpec((block_rows, LANE),
                           lambda c, b: (c * blocks_per_core + b, 0))
    out_spec = pl.BlockSpec((1, SUBLANE, LANE), lambda c, b: (c, 0, 0))

    partials = pl.pallas_call(
        kernel,
        out_shape=jax.ShapeDtypeStruct((NCORES, SUBLANE, LANE), jnp.float32),
        grid_spec=pltpu.PrefetchScalarGridSpec(
            num_scalar_prefetch=0,
            grid=(NCORES, blocks_per_core),
            in_specs=[in_spec, in_spec],
            out_specs=out_spec,
            scratch_shapes=[pltpu.VMEM((SUBLANE, LANE), jnp.float32)],
        ),
        compiler_params=pltpu.CompilerParams(
            dimension_semantics=("parallel", "arbitrary")),
    )(p2, t2)

    total = partials.sum()
    if reduction == "mean":
        return total / jnp.float32(n)
    return total


def _reference(pred, true, gamma=1.5, alpha=0.25):
    # Plain-JAX reference matching the PyTorch QFocalLoss (BCEWithLogits, mean).
    x = pred.astype(jnp.float32)
    y = true.astype(jnp.float32)
    bce = jnp.maximum(x, 0.0) - x * y + jnp.log1p(jnp.exp(-jnp.abs(x)))
    p = jax.nn.sigmoid(x)
    alpha_factor = y * alpha + (1.0 - y) * (1.0 - alpha)
    modulating_factor = jnp.abs(y - p) ** gamma
    return jnp.mean(bce * alpha_factor * modulating_factor)


if __name__ == "__main__":
    key = jax.random.PRNGKey(0)
    k1, k2 = jax.random.split(key)
    # NCHW, like a YOLO objectness/cls logit map: (B=2, C=4, H=16, W=16)
    pred = jax.random.normal(k1, (2, 4, 16, 16), dtype=jnp.float32)
    true = (jax.random.uniform(k2, (2, 4, 16, 16)) > 0.5).astype(jnp.float32)

    out = qfocal_loss(pred, true, gamma=1.5, alpha=0.25)
    out = jax.block_until_ready(out)

    ref = _reference(pred, true, gamma=1.5, alpha=0.25)
    assert jnp.allclose(out, ref, rtol=1e-4, atol=1e-6), (out, ref)

    print("KERNEL_OK")
</pallas_src>

<mosaic_0001>
module attributes {stable_mosaic.version = 11 : i64} {
  func.func @_qfocal_kernel(%arg0: i32, %arg1: i32, %arg2: memref<8x128xf32, #tpu.memory_space<vmem>>, %arg3: memref<8x128xf32, #tpu.memory_space<vmem>>, %arg4: memref<1x8x128xf32, #tpu.memory_space<vmem>>, %arg5: memref<8x128xf32, #tpu.memory_space<vmem>>) attributes {dimension_semantics = [#tpu.dimension_semantics<parallel>, #tpu.dimension_semantics<arbitrary>], iteration_bounds = array<i64: 2, 1>, scalar_prefetch = 0 : i64, scratch_operands = 1 : i64, tpu.core_type = #tpu.core_type<tc>, window_params = [{transform_indices = @transform_0, window_bounds = array<i64: 8, 128>}, {transform_indices = @transform_1, window_bounds = array<i64: 8, 128>}, {transform_indices = @transform_2, window_bounds = array<i64: 1, 8, 128>}]} {
    %c0_i32 = arith.constant 0 : i32
    %0 = arith.cmpi eq, %arg1, %c0_i32 : i32
    %1 = arith.extui %0 : i1 to i32
    %c0_i32_0 = arith.constant 0 : i32
    %2 = arith.cmpi ne, %1, %c0_i32_0 : i32
    scf.if %2 {
      %cst_18 = arith.constant 0.000000e+00 : f32
      %43 = vector.broadcast %cst_18 : f32 to vector<8x128xf32>
      %c0_19 = arith.constant 0 : index
      %c0_20 = arith.constant 0 : index
      %44 = vector.load %arg5[%c0_19, %c0_20] : memref<8x128xf32, #tpu.memory_space<vmem>>, vector<8x128xf32>
      tpu.vector_store %arg5[%c0_19, %c0_20], %43 {strides = array<i32>} : memref<8x128xf32, #tpu.memory_space<vmem>>, vector<8x128xf32>,
    } else {
    }
    %c0 = arith.constant 0 : index
    %c0_1 = arith.constant 0 : index
    %3 = vector.load %arg2[%c0, %c0_1] : memref<8x128xf32, #tpu.memory_space<vmem>>, vector<8x128xf32>
    %c0_2 = arith.constant 0 : index
    %c0_3 = arith.constant 0 : index
    %4 = vector.load %arg3[%c0_2, %c0_3] : memref<8x128xf32, #tpu.memory_space<vmem>>, vector<8x128xf32>
    %5 = math.absf %3 : vector<8x128xf32>
    %cst = arith.constant 0.000000e+00 : f32
    %6 = vector.broadcast %cst : f32 to vector<8x128xf32>
    %7 = arith.subf %6, %5 : vector<8x128xf32>
    %8 = math.exp %7 : vector<8x128xf32>
    %cst_4 = arith.constant 0.000000e+00 : f32
    %9 = vector.broadcast %cst_4 : f32 to vector<8x128xf32>
    %10 = arith.maximumf %3, %9 : vector<8x128xf32>
    %11 = arith.mulf %3, %4 : vector<8x128xf32>
    %12 = arith.subf %10, %11 : vector<8x128xf32>
    %13 = math.log1p %8 : vector<8x128xf32>
    %14 = arith.addf %12, %13 : vector<8x128xf32>
    %cst_5 = arith.constant 0.000000e+00 : f32
    %15 = vector.broadcast %cst_5 : f32 to vector<8x128xf32>
    %16 = arith.cmpf oge, %3, %15 : vector<8x128xf32>
    %cst_6 = arith.constant 1.000000e+00 : f32
    %17 = vector.broadcast %cst_6 : f32 to vector<8x128xf32>
    %18 = arith.select %16, %17, %8 : vector<8x128xi1>, vector<8x128xf32>
    %cst_7 = arith.constant 1.000000e+00 : f32
    %19 = vector.broadcast %cst_7 : f32 to vector<8x128xf32>
    %20 = arith.addf %19, %8 : vector<8x128xf32>
    %21 = arith.divf %18, %20 : vector<8x128xf32>
    %cst_8 = arith.constant 2.500000e-01 : f32
    %22 = vector.broadcast %cst_8 : f32 to vector<8x128xf32>
    %23 = arith.mulf %4, %22 : vector<8x128xf32>
    %cst_9 = arith.constant 1.000000e+00 : f32
    %24 = vector.broadcast %cst_9 : f32 to vector<8x128xf32>
    %25 = arith.subf %24, %4 : vector<8x128xf32>
    %cst_10 = arith.constant 7.500000e-01 : f32
    %26 = vector.broadcast %cst_10 : f32 to vector<8x128xf32>
    %27 = arith.mulf %25, %26 : vector<8x128xf32>
    %28 = arith.addf %23, %27 : vector<8x128xf32>
    %29 = arith.subf %4, %21 : vector<8x128xf32>
    %30 = math.absf %29 : vector<8x128xf32>
    %31 = math.sqrt %30 : vector<8x128xf32>
    %32 = arith.mulf %30, %31 : vector<8x128xf32>
    %33 = arith.mulf %14, %28 : vector<8x128xf32>
    %34 = arith.mulf %33, %32 : vector<8x128xf32>
    %c0_11 = arith.constant 0 : index
    %c0_12 = arith.constant 0 : index
    %35 = vector.load %arg5[%c0_11, %c0_12] : memref<8x128xf32, #tpu.memory_space<vmem>>, vector<8x128xf32>
    %36 = vector.shape_cast %34 : vector<8x128xf32> to vector<1x8x128xf32>
    %cst_13 = arith.constant dense<0.000000e+00> : vector<8x128xf32>
    %37 = vector.multi_reduction <add>, %36, %cst_13 [0] : vector<1x8x128xf32> to vector<8x128xf32>
    %38 = arith.addf %35, %37 : vector<8x128xf32>
    %c0_14 = arith.constant 0 : index
    %c0_15 = arith.constant 0 : index
    %39 = vector.load %arg5[%c0_14, %c0_15] : memref<8x128xf32, #tpu.memory_space<vmem>>, vector<8x128xf32>
    tpu.vector_store %arg5[%c0_14, %c0_15], %38 {strides = array<i32>} : memref<8x128xf32, #tpu.memory_space<vmem>>, vector<8x128xf32>,
    %c0_i32_16 = arith.constant 0 : i32
    %40 = arith.cmpi eq, %arg1, %c0_i32_16 : i32
    %41 = arith.extui %40 : i1 to i32
    %c0_i32_17 = arith.constant 0 : i32
    %42 = arith.cmpi ne, %41, %c0_i32_17 : i32
    scf.if %42 {
      %c0_18 = arith.constant 0 : index
      %c0_19 = arith.constant 0 : index
      %43 = vector.load %arg5[%c0_18, %c0_19] : memref<8x128xf32, #tpu.memory_space<vmem>>, vector<8x128xf32>
      %44 = vector.shape_cast %43 : vector<8x128xf32> to vector<1x8x128xf32>
      %c0_20 = arith.constant 0 : index
      %c0_21 = arith.constant 0 : index
      %c0_22 = arith.constant 0 : index
      %45 = vector.load %arg4[%c0_20, %c0_21, %c0_22] : memref<1x8x128xf32, #tpu.memory_space<vmem>>, vector<1x8x128xf32>
      tpu.vector_store %arg4[%c0_20, %c0_21, %c0_22], %44 {strides = array<i32>} : memref<1x8x128xf32, #tpu.memory_space<vmem>>, vector<1x8x128xf32>,
    } else {
    }
    return
  }
  func.func @transform_0(%arg0: i32, %arg1: i32) -> (i32, i32) {
    %c1_i32 = arith.constant 1 : i32
    %0 = arith.muli %arg0, %c1_i32 : i32
    %1 = arith.addi %0, %arg1 : i32
    %c0_i32 = arith.constant 0 : i32
    %c0_i32_0 = arith.constant 0 : i32
    return %1, %c0_i32 : i32, i32
  }
  func.func @transform_1(%arg0: i32, %arg1: i32) -> (i32, i32) {
    %c1_i32 = arith.constant 1 : i32
    %0 = arith.muli %arg0, %c1_i32 : i32
    %1 = arith.addi %0, %arg1 : i32
    %c0_i32 = arith.constant 0 : i32
    %c0_i32_0 = arith.constant 0 : i32
    return %1, %c0_i32 : i32, i32
  }
  func.func @transform_2(%arg0: i32, %arg1: i32) -> (i32, i32, i32) {
    %c0_i32 = arith.constant 0 : i32
    %c0_i32_0 = arith.constant 0 : i32
    %c0_i32_1 = arith.constant 0 : i32
    return %arg0, %c0_i32, %c0_i32_0 : i32, i32, i32
  }
}

</mosaic_0001>

<llo_original>
// kernel: tpu_custom_call.1
$region0: #{tpu_custom_call.1}
  #allocation0 [shape = 'u32[]', space=smem, size = 0x4, offset = 0x4, fixed_abs, tag = 'smem constant byte address 0x4 - core index']
  #allocation1 [shape = 'u32[144,128]{1,0:T(1,128)}', space=vmem, size = 0x12000, scoped, tag = 'internal scratch']
  #allocation2 [shape = 'f32[8,128]{1,0:T(8,128)}', space=vmem, size = 0x1000, scoped, tag = 'scratch operand']
  %s0 = inlined_call_operand.hbm [shape: f32[16,128], index: 0, kind: input, shape index: {}]
  %s1 = inlined_call_operand.hbm [shape: f32[16,128], index: 1, kind: input, shape index: {}]
  %s2 = inlined_call_operand.hbm [shape: f32[2,8,128], index: 2, kind: output, shape index: {}]
  %s3 = sld [smem:[#allocation0]]
  $region57: #{tpu_custom_call.1} parent=0
    _
  %s5 = ssub.s32 1, %s3
  %s6 = scalar_select 0, %s5, %s3
  $region1: #{tpu_custom_call.1} parent=0
    #allocation3 [shape = 'u8[8192]{0}', space=vmem, size = 0x2000, scoped, tag = 'input window, operand 0']
    #allocation4 [shape = 's32[2]{0}', space=sflag, size = 0x8, scoped, tag = 'scoped memory for tpu_custom_call.1']
    #allocation5 [shape = 's32[2]{0}', space=sflag, size = 0x8, scoped, tag = 'scoped memory for tpu_custom_call.1']
    #allocation6 [shape = 'u8[8192]{0}', space=vmem, size = 0x2000, scoped, tag = 'input window, operand 1']
    #allocation7 [shape = 's32[2]{0}', space=sflag, size = 0x8, scoped, tag = 'scoped memory for tpu_custom_call.1']
    #allocation8 [shape = 'u8[8192]{0}', space=vmem, size = 0x2000, scoped, tag = 'output window, operand 0']
    %7 = vsyncpa [#allocation4], 0
    %s8 = scalar_lea.sflag [#allocation4], 1
    %9 = vsyncpa %s8, 0
    %10 = vsyncpa [#allocation7], 0
    %s11 = scalar_lea.sflag [#allocation7], 1
    %12 = vsyncpa %s11, 0
    %13 = vsyncpa [#allocation5], 0
    %s14 = scalar_lea.sflag [#allocation5], 1
    %15 = vsyncpa %s14, 0
    loop: start=0, step=1, limit=4
    $region2: #{tpu_custom_call.1} parent=1 // loop_pre_header
      _
    $region3: #{tpu_custom_call.1} parent=1 // loop_header
      %s17 = sphi 0, %s21
      %p18 = scmp.ge.s32.totalorder %s17, 4
      %s24 = sphi 0, %s36
      %s25 = sphi 0, %s32
      %s26 = sphi 0, %s24
      %s27 = sphi 0, %s25
      %s28 = sphi 0, %s26
      %s29 = sphi 0, %s27
      %s41 = sphi 0, %s43
      %s44 = sphi 0, %s41
      %s45 = sphi 0, %s44
      %s61 = sphi 0, %s45
      %s69 = sphi 0, %s71
      %s72 = sphi 0, %s69
      %s73 = sphi 0, %s72
      %s89 = sphi 0, %s73
      %s95 = sphi 0, %s97
      %s98 = sphi 0, %s95
      %s99 = sphi 0, %s98
      %s115 = sphi 0, %s99
    $region4: #{tpu_custom_call.1} parent=1 // loop_header_branch
      %20 = sbr.rel (%p18) target = $region8
    $region5: #{tpu_custom_call.1} parent=1 // loop_body
      %s22 = ssub.s32 %s17, 1
      %s23 = ssub.s32 %s17, 2
      %s30 = sadd.s32 1, %s25
      %p31 = scmp.ge.s32.totalorder %s30, 1
      %s32 = scalar_select %p31, 0, %s30
      %s33 = sadd.s32 1, %s24
      %s34 = scalar_select %p31, %s33, %s24
      %p35 = scmp.ge.s32.totalorder %s34, 2
      %s36 = scalar_select %p35, 0, %s34
      %s37 = sadd.s32 %s24, %s25
      %s38 = sadd.s32 %s36, %s32
      %s39 = ssub.s32 %s37, %s38
      %p40 = scmp.eq.s32.totalorder %s39, 0
      %s42 = sadd.s32 %s41, 1
      %s43 = scalar_select %p40, %s41, %s42
      %p46 = pneg %p40
      %p47 = scmp.eq.s32.totalorder %s17, 1
      %p48 = por %p46, %p47
      %p49 = scmp.ne.s32.totalorder %s41, %s44
      %p50 = scmp.eq.s32.totalorder %s17, 0
      %p51 = por %p49, %p50
      %p52 = scmp.ne.s32.totalorder %s41, %s44
      %p53 = scmp.eq.s32.totalorder %s22, 1
      %p54 = por %p52, %p53
      %p55 = scmp.ne.s32.totalorder %s44, %s45
      %p56 = scmp.eq.s32.totalorder %s22, 0
      %p57 = por %p55, %p56
      %p58 = scmp.ne.s32.totalorder %s44, %s45
      %p59 = scmp.eq.s32.totalorder %s23, 1
      %p60 = por %p58, %p59
      %p62 = scmp.ne.s32.totalorder %s45, %s61
      %p63 = scmp.eq.s32.totalorder %s23, 0
      %p64 = por %p62, %p63
      %s65 = sadd.s32 %s24, %s25
      %s66 = sadd.s32 %s36, %s32
      %s67 = ssub.s32 %s65, %s66
      %p68 = scmp.eq.s32.totalorder %s67, 0
      %s70 = sadd.s32 %s69, 1
      %s71 = scalar_select %p68, %s69, %s70
      %p74 = pneg %p68
      %p75 = scmp.eq.s32.totalorder %s17, 1
      %p76 = por %p74, %p75
      %p77 = scmp.ne.s32.totalorder %s69, %s72
      %p78 = scmp.eq.s32.totalorder %s17, 0
      %p79 = por %p77, %p78
      %p80 = scmp.ne.s32.totalorder %s69, %s72
      %p81 = scmp.eq.s32.totalorder %s22, 1
      %p82 = por %p80, %p81
      %p83 = scmp.ne.s32.totalorder %s72, %s73
      %p84 = scmp.eq.s32.totalorder %s22, 0
      %p85 = por %p83, %p84
      %p86 = scmp.ne.s32.totalorder %s72, %s73
      %p87 = scmp.eq.s32.totalorder %s23, 1
      %p88 = por %p86, %p87
      %p90 = scmp.ne.s32.totalorder %s73, %s89
      %p91 = scmp.eq.s32.totalorder %s23, 0
      %p92 = por %p90, %p91
      %s93 = ssub.s32 %s24, %s36
      %p94 = scmp.eq.s32.totalorder %s93, 0
      %s96 = sadd.s32 %s95, 1
      %s97 = scalar_select %p94, %s95, %s96
      %p100 = pneg %p94
      %p101 = scmp.eq.s32.totalorder %s17, 1
      %p102 = por %p100, %p101
      %p103 = scmp.ne.s32.totalorder %s95, %s98
      %p104 = scmp.eq.s32.totalorder %s17, 0
      %p105 = por %p103, %p104
      %p106 = scmp.ne.s32.totalorder %s95, %s98
      %p107 = scmp.eq.s32.totalorder %s22, 1
      %p108 = por %p106, %p107
      %p109 = scmp.ne.s32.totalorder %s98, %s99
      %p110 = scmp.eq.s32.totalorder %s22, 0
      %p111 = por %p109, %p110
      %p112 = scmp.ne.s32.totalorder %s98, %s99
      %p113 = scmp.eq.s32.totalorder %s23, 1
      %p114 = por %p112, %p113
      %p116 = scmp.ne.s32.totalorder %s99, %s115
      %p117 = scmp.eq.s32.totalorder %s23, 0
      %p118 = por %p116, %p117
      %p119 = scmp.le.s32.totalorder 1, %s17
      %p120 = scmp.lt.s32.totalorder %s17, 3
      %p121 = pnand %p119, %p120
      %p122 = pneg %p121
      // Predicated region
      $region9: #{tpu_custom_call.1} parent=5 // pred_check
        _
      $region10: #{tpu_custom_call.1} parent=5 // pred_check_branch
        %124 = sbr.rel (%p121) target = $region12
      $region11: #{tpu_custom_call.1} parent=5 // pred_region
        %s125 = ssub.s32 %s17, 1
      $region12: #{tpu_custom_call.1} parent=5 // pred_fallthru
        _
      %p126 = scmp.lt.s32.totalorder %s17, 2
      // Predicated region
      $region13: #{tpu_custom_call.1} parent=5 // pred_check
        %p127 = pneg %p126
      $region14: #{tpu_custom_call.1} parent=5 // pred_check_branch
        %129 = sbr.rel (%p127) target = $region16
      $region15: #{tpu_custom_call.1} parent=5 // pred_region
        // Predicated region
        $region17: #{tpu_custom_call.1} parent=15 // pred_check
          %p130 = pneg %p51
        $region18: #{tpu_custom_call.1} parent=15 // pred_check_branch
          %132 = sbr.rel (%p130) target = $region20
        $region19: #{tpu_custom_call.1} parent=15 // pred_region
          %s133 = sand.u32 %s41, 1
          %s134 = scalar_lea.sflag [#allocation4], %s133
          %s135 = sand.u32 %s41, 1
          %s136 = smul.addr %s135, 8
          %s137 = scalar_lea.vmem [#allocation3], %s136
          %s138 = sadd.s32 %s24, %s25
          %s140 = ssub.s32 128, 128
          %141 = vsyncadd %s134, %s140
          %s142 = smul.addr %s138, 128
          %s143 = scalar_lea.hbm %s0, %s142
          %s145 = sshll.u32 %s137, 4
          %s146 = int_to_ptr.vmem [resolvable:$true] %s145
          %148 = dma.hbm_to_vmem [thread:$0]  %s143, 128, %s146, %s134
        $region20: #{tpu_custom_call.1} parent=15 // pred_fallthru
          _
        // Predicated region
        $region21: #{tpu_custom_call.1} parent=15 // pred_check
          %p149 = pneg %p79
        $region22: #{tpu_custom_call.1} parent=15 // pred_check_branch
          %151 = sbr.rel (%p149) target = $region24
        $region23: #{tpu_custom_call.1} parent=15 // pred_region
          %s152 = sand.u32 %s69, 1
          %s153 = scalar_lea.sflag [#allocation7], %s152
          %s154 = sand.u32 %s69, 1
          %s155 = smul.addr %s154, 8
          %s156 = scalar_lea.vmem [#allocation6], %s155
          %s157 = sadd.s32 %s24, %s25
          %s159 = ssub.s32 128, 128
          %160 = vsyncadd %s153, %s159
          %s161 = smul.addr %s157, 128
          %s162 = scalar_lea.hbm %s1, %s161
          %s164 = sshll.u32 %s156, 4
          %s165 = int_to_ptr.vmem [resolvable:$true] %s164
          %167 = dma.hbm_to_vmem [thread:$0]  %s162, 128, %s165, %s153
        $region24: #{tpu_custom_call.1} parent=15 // pred_fallthru
          _
      $region16: #{tpu_custom_call.1} parent=5 // pred_fallthru
        _
      %p168 = scmp.le.s32.totalorder 1, %s17
      %p169 = scmp.lt.s32.totalorder %s17, 3
      %p170 = pnand %p168, %p169
      %p171 = pneg %p170
      // Predicated region
      $region25: #{tpu_custom_call.1} parent=5 // pred_check
        _
      $region26: #{tpu_custom_call.1} parent=5 // pred_check_branch
        %173 = sbr.rel (%p170) target = $region28
      $region27: #{tpu_custom_call.1} parent=5 // pred_region
        %s174 = ssub.s32 %s17, 1
        %s175 = sand.u32 %s44, 1
        %s176 = scalar_lea.sflag [#allocation4], %s175
        %s177 = sand.u32 %s44, 1
        %s178 = smul.addr %s177, 8
        %s179 = scalar_lea.vmem [#allocation3], %s178
        // Predicated region
        $region29: #{tpu_custom_call.1} parent=27 // pred_check
          %p180 = pneg %p57
        $region30: #{tpu_custom_call.1} parent=27 // pred_check_branch
          %182 = sbr.rel (%p180) target = $region32
        $region31: #{tpu_custom_call.1} parent=27 // pred_region
          %183 = dma.done %s176, 128
        $region32: #{tpu_custom_call.1} parent=27 // pred_fallthru
          _
        %s184 = sand.u32 %s72, 1
        %s185 = scalar_lea.sflag [#allocation7], %s184
        %s186 = sand.u32 %s72, 1
        %s187 = smul.addr %s186, 8
        %s188 = scalar_lea.vmem [#allocation6], %s187
        // Predicated region
        $region33: #{tpu_custom_call.1} parent=27 // pred_check
          %p189 = pneg %p85
        $region34: #{tpu_custom_call.1} parent=27 // pred_check_branch
          %191 = sbr.rel (%p189) target = $region36
        $region35: #{tpu_custom_call.1} parent=27 // pred_region
          %192 = dma.done %s185, 128
        $region36: #{tpu_custom_call.1} parent=27 // pred_fallthru
          _
        %s193 = sand.u32 %s44, 1
        %s194 = scalar_lea.sflag [#allocation4], %s193
        %s195 = sand.u32 %s44, 1
        %s196 = smul.addr %s195, 8
        %s197 = scalar_lea.vmem [#allocation3], %s196
        %p198 = pneg %p57
        %p199 = pneg %p54
        %s200 = sand.u32 %s72, 1
        %s201 = scalar_lea.sflag [#allocation7], %s200
        %s202 = sand.u32 %s72, 1
        %s203 = smul.addr %s202, 8
        %s204 = scalar_lea.vmem [#allocation6], %s203
        %p205 = pneg %p85
        %p206 = pneg %p82
        %p207 = pneg %p111
        %p208 = pneg %p108
        %s209 = sand.u32 %s98, 1
        %s210 = scalar_lea.sflag [#allocation5], %s209
        %s211 = sand.u32 %s98, 1
        %s212 = smul.addr %s211, 8
        %s213 = scalar_lea.vmem [#allocation8], %s212
        %s214 = sadd.s32 %s26, %s27
        %s215 = sadd.s32 %s26, %s27
        %p216 = scmp.eq.s32.totalorder %s27, 0
        // Predicated region
        $region37: #{tpu_custom_call.1} parent=27 // pred_check
          %p217 = pneg %p216
        $region38: #{tpu_custom_call.1} parent=27 // pred_check_branch
          %219 = sbr.rel (%p217) target = $region40
        $region39: #{tpu_custom_call.1} parent=27 // pred_region
          %220 = vst [vmem:[#allocation2] sm:$0xff] 0.0
        $region40: #{tpu_custom_call.1} parent=27 // pred_fallthru
          _
        %v221 = vld [vmem:[%s179] sm:$0xff]
        %v222 = vld [vmem:[%s188] sm:$0xff]
        %v223 = vand.u32 2147483647, %v221
        %v224 = vsub.f32 0.0, %v223
        %v225 = vmul.f32 %v224, 1.442695
        %v226 = vpow.pop %v225
        %v227 = vmax.f32 %v221, 0.0
        %v228 = vmul.f32 %v221, %v222
        %v229 = vsub.f32 %v227, %v228
        %v230 = vadd.f32 %v226, 1.0
        %v231 = vlog2.pop %v230
        %v232 = vmul.f32 %v231, 0.6931472
        %v233 = vmul.f32 -0.5, %v226
        %v234 = vadd.f32 %v233, 1.0
        %v235 = vmul.f32 %v234, %v226
        %v236 = vand.u32 2147483647, %v226
        %vm237 = vcmp.lt.f32.partialorder %v236, 0.0004427343
        %v238 = vsel %vm237, %v235, %v232
        %v239 = vadd.f32 %v229, %v238
        %vm240 = vcmp.ge.f32.partialorder %v221, 0.0
        %v241 = vsel %vm240, 1.0, %v226
        %v242 = vadd.f32 %v226, 1.0
        %v243 = vrcp.pop %v242
        %v244 = vmul.f32 %v241, %v243
        %v245 = vmul.f32 %v222, 0.25
        %v246 = vsub.f32 1.0, %v222
        %v247 = vmul.f32 %v246, 0.75
        %v248 = vadd.f32 %v245, %v247
        %v249 = vsub.f32 %v222, %v244
        %v250 = vand.u32 2147483647, %v249
        %v251 = vrsqrt.pop %v250
        %v252 = vmul.f32 %v250, %v251
        %vm253 = vcmp.eq.f32.partialorder %v250, inf
        %v254 = vsel %vm253, %v250, %v252
        %vm255 = vcmp.eq.f32.partialorder %v250, 0.0
        %v256 = vand.u32 %v250, 2147483648
        %v257 = vsel %vm255, %v256, %v254
        %v258 = vmul.f32 %v250, %v257
        %v259 = vmul.f32 %v239, %v248
        %v260 = vmul.f32 %v259, %v258
        %v261 = vld [vmem:[#allocation2] sm:$0xff]
        %v262 = vadd.f32 %v260, 0.0
        %v263 = vadd.f32 %v261, %v262
        %264 = vst [vmem:[#allocation2] sm:$0xff] %v263
        // Predicated region
        $region41: #{tpu_custom_call.1} parent=27 // pred_check
          %p265 = pneg %p216
        $region42: #{tpu_custom_call.1} parent=27 // pred_check_branch
          %267 = sbr.rel (%p265) target = $region44
        $region43: #{tpu_custom_call.1} parent=27 // pred_region
          %v268 = vld [vmem:[#allocation2] sm:$0xff]
          %269 = vst [vmem:[%s213] sm:$0xff] %v268
        $region44: #{tpu_custom_call.1} parent=27 // pred_fallthru
          _
        %s270 = sand.u32 %s98, 1
        %s271 = scalar_lea.sflag [#allocation5], %s270
        %s272 = sand.u32 %s98, 1
        %s273 = smul.addr %s272, 8
        %s274 = scalar_lea.vmem [#allocation8], %s273
        // Predicated region
        $region45: #{tpu_custom_call.1} parent=27 // pred_check
          %p275 = pneg %p108
        $region46: #{tpu_custom_call.1} parent=27 // pred_check_branch
          %277 = sbr.rel (%p275) target = $region48
        $region47: #{tpu_custom_call.1} parent=27 // pred_region
          %s279 = ssub.s32 128, 128
          %280 = vsyncadd %s271, %s279
          %s281 = smul.addr %s26, 128
          %s282 = scalar_lea.hbm %s2, %s281
          %s284 = sshll.u32 %s274, 4
          %s285 = int_to_ptr.vmem [resolvable:$true] %s284
          %287 = dma.vmem_to_hbm [thread:$0]  %s285, 128, %s282, %s271
        $region48: #{tpu_custom_call.1} parent=27 // pred_fallthru
          _
      $region28: #{tpu_custom_call.1} parent=5 // pred_fallthru
        _
      %p288 = scmp.le.s32.totalorder 2, %s17
      // Predicated region
      $region49: #{tpu_custom_call.1} parent=5 // pred_check
        %p289 = pneg %p288
      $region50: #{tpu_custom_call.1} parent=5 // pred_check_branch
        %291 = sbr.rel (%p289) target = $region52
      $region51: #{tpu_custom_call.1} parent=5 // pred_region
        %s292 = ssub.s32 %s17, 2
        // Predicated region
        $region53: #{tpu_custom_call.1} parent=51 // pred_check
          %p293 = pneg %p114
        $region54: #{tpu_custom_call.1} parent=51 // pred_check_branch
          %295 = sbr.rel (%p293) target = $region56
        $region55: #{tpu_custom_call.1} parent=51 // pred_region
          %s296 = sand.u32 %s99, 1
          %s297 = scalar_lea.sflag [#allocation5], %s296
          %s298 = sand.u32 %s99, 1
          %s299 = smul.addr %s298, 8
          %s300 = scalar_lea.vmem [#allocation8], %s299
          %301 = dma.done %s297, 128
        $region56: #{tpu_custom_call.1} parent=51 // pred_fallthru
          _
      $region52: #{tpu_custom_call.1} parent=5 // pred_fallthru
        _
    $region6: #{tpu_custom_call.1} parent=1 // loop_footer
      %s21 = sadd.s32 1, %s17
    $region7: #{tpu_custom_call.1} parent=1 // loop_footer_branch
      %16 = sbr.rel target = $region3
    $region8: #{tpu_custom_call.1} parent=1 // loop_exit
      _
    %302 = vsyncpa [#allocation4], 1
    %s303 = scalar_lea.sflag [#allocation4], 1
    %304 = vsyncpa %s303, 1
    %305 = vsyncpa [#allocation7], 1
    %s306 = scalar_lea.sflag [#allocation7], 1
    %307 = vsyncpa %s306, 1
    %308 = vsyncpa [#allocation5], 1
    %s309 = scalar_lea.sflag [#allocation5], 1
    %310 = vsyncpa %s309, 1

</llo_original>
